<compile_context>
chip_gen: v6e
topology: v6e:2x2x1
jax: 0.10.0
libtpu: 0.0.40
codegen_flags: <defaults>
</compile_context>

<pallas_src>
import functools

import numpy as np

import jax
import jax.numpy as jnp
from jax import lax
from jax.experimental import pallas as pl
from jax.experimental.pallas import tpu as pltpu

_INV_SQRT2 = 0.7071067811865476
_SQRT_2_OVER_PI = 0.7978845608028654


def _adaptive_lfe_kernel(x_ref, w0_ref, cp_ref, w1_ref, b1_ref, o_ref,
                         pad_l, pad_c, pad_r, *, H, W, pad_off, approx_gelu):
    """Processes a (Bt, C, H*W) block; channel-major lane-dense layout."""
    HW = H * W
    Bt = x_ref.shape[0]

    # Packed per-channel params: [0:9] depthwise taps (alpha-folded),
    # [9] conv_0 bias, [10] b3*alpha + beta.
    w3 = cp_ref[:, 0:9]                                 # (hid, 9)
    b0 = cp_ref[:, 9:10]                                # (hid, 1)
    bdw = cp_ref[:, 10:11]                              # (hid, 1)
    hid = w3.shape[0]

    # Column-boundary masks (geometry only; computed once per grid step).
    col = lax.broadcasted_iota(jnp.int32, (1, HW), 1) % W
    left_ok = col != 0                                  # col j-1 in bounds
    right_ok = col != (W - 1)                           # col j+1 in bounds

    # Zero the halo regions of the row-padded scratch planes.  Scratch
    # persists across grid steps and the interior writes below never touch
    # the halos, but re-zeroing every step keeps megacore-split grids safe.
    zpad = jnp.zeros((hid, pad_off), jnp.float32)
    for p in (pad_l, pad_c, pad_r):
        p[:, 0:pad_off] = zpad
        p[:, pad_off + HW:pad_off + HW + pad_off] = zpad

    w0 = w0_ref[...]                                    # (hid, C)
    w1 = w1_ref[...]                                    # (C, hid)
    b1 = b1_ref[...]                                    # (C, 1)

    for b in range(Bt):                                 # static batch-tile loop
        x = x_ref[b]                                    # (C, HW)

        # ---- conv_0: 1x1 conv == (hid, C) @ (C, HW) MXU matmul ----
        h = jnp.dot(w0, x, preferred_element_type=jnp.float32) + b0

        # ---- depthwise 3x3 (pad=1); alpha/beta folded into w3/bdw ----
        # Column shifts: the only remaining cross-lane ops (2 rolls + masks).
        hl = jnp.where(left_ok, pltpu.roll(h, shift=1, axis=1), 0.0)
        hr = jnp.where(right_ok, pltpu.roll(h, shift=HW - 1, axis=1), 0.0)
        # Row shifts: offset loads from zero-row-padded scratch planes.
        pad_l[:, pad_off:pad_off + HW] = hl
        pad_c[:, pad_off:pad_off + HW] = h
        pad_r[:, pad_off:pad_off + HW] = hr
        up = pad_off - W
        dn = pad_off + W
        acc = (pad_l[:, up:up + HW] * w3[:, 0:1]        # tap (-1, -1)
               + pad_c[:, up:up + HW] * w3[:, 1:2]      # tap (-1,  0)
               + pad_r[:, up:up + HW] * w3[:, 2:3]      # tap (-1, +1)
               + hl * w3[:, 3:4]                        # tap ( 0, -1)
               + h * w3[:, 4:5]                         # tap ( 0,  0)
               + hr * w3[:, 5:6]                        # tap ( 0, +1)
               + pad_l[:, dn:dn + HW] * w3[:, 6:7]      # tap (+1, -1)
               + pad_c[:, dn:dn + HW] * w3[:, 7:8]      # tap (+1,  0)
               + pad_r[:, dn:dn + HW] * w3[:, 8:9]      # tap (+1, +1)
               + bdw)

        # ---- GELU ----
        if approx_gelu:   # tanh form runs on the EUP (separate VLIW slot)
            g = 0.5 * acc * (1.0 + jnp.tanh(
                jnp.float32(_SQRT_2_OVER_PI)
                * (acc + jnp.float32(0.044715) * acc * acc * acc)))
        else:             # exact erf GELU (PyTorch parity)
            g = 0.5 * acc * (1.0 + lax.erf(acc * jnp.float32(_INV_SQRT2)))

        # ---- conv_1: 1x1 conv == (C, hid) @ (hid, HW) MXU matmul ----
        out = jnp.dot(w1, g.astype(w1.dtype),
                      preferred_element_type=jnp.float32) + b1
        o_ref[b] = out.astype(o_ref.dtype)


def _pick_batch_tile(N, img_bytes, target_bytes=2 << 20, cap=8):
    """Largest divisor of N with ~<=2 MiB per block; keep >=2 grid steps."""
    limit = min(cap, max(1, N // 2))
    bt = 1
    for cand in range(1, limit + 1):
        if N % cand == 0 and cand * img_bytes <= target_bytes:
            bt = cand
    return bt


def _pick_vmem_limit(block_bytes, scratch_bytes, weight_bytes, temp_bytes):
    need = 2 * block_bytes + scratch_bytes + weight_bytes + temp_bytes
    need = int(need * 1.5) + (8 << 20)                  # headroom
    try:
        phys = int(pltpu.get_tpu_info().vmem_capacity_bytes)
    except Exception:
        phys = 64 << 20                                 # conservative (v7x)
    cap = (phys * 3) // 4
    return max(min(need, cap), min(32 << 20, cap))


@functools.partial(jax.jit,
                   static_argnames=("use_bf16_matmul", "approximate_gelu"))
def adaptive_lfe(x_nchw, params, use_bf16_matmul=False, approximate_gelu=False):
    """x_nchw: (N, C, H, W).  Returns (N, C, H, W) in x's dtype."""
    w0, b0, w3, b3, alpha, beta, w1, b1 = params
    N, C, H, W = x_nchw.shape
    hid = w0.shape[0]
    HW = H * W

    mm_dtype = jnp.bfloat16 if use_bf16_matmul else x_nchw.dtype
    in_isz = np.dtype(mm_dtype).itemsize
    out_isz = np.dtype(x_nchw.dtype).itemsize

    # Free reshape: NCHW is already channel-major.  Cast x only in bf16 mode
    # (halves HBM bytes of the dominant input stream; no in-kernel cast).
    x_flat = x_nchw.reshape(N, C, HW).astype(mm_dtype)
    w0_c = w0.astype(mm_dtype)
    w1_c = w1.astype(mm_dtype)

    # Fold the (alpha, beta) affine into the depthwise conv weights/bias and
    # pack all small per-channel params into one (hid, 11) ref.
    w3_eff = (w3 * alpha[:, None, None]).reshape(hid, 9)
    b_dw = (b3 * alpha + beta).reshape(hid, 1)
    cp = jnp.concatenate(
        [w3_eff, b0.reshape(hid, 1), b_dw], axis=1).astype(jnp.float32)
    b1_c = b1.reshape(C, 1).astype(jnp.float32)

    # Batch tile and lane-aligned halo size for the row-padded scratch.
    img_bytes = C * HW * (in_isz + out_isz)
    Bt = _pick_batch_tile(N, img_bytes)
    pad_off = ((W + 127) // 128) * 128                  # >= W, lane-aligned
    padw = HW + 2 * pad_off

    block_bytes = Bt * img_bytes
    scratch_bytes = 3 * hid * padw * 4
    weight_bytes = (w0_c.size + w1_c.size) * in_isz + (cp.size + b1_c.size) * 4
    temp_bytes = 6 * hid * HW * 4
    vmem_limit = _pick_vmem_limit(block_bytes, scratch_bytes, weight_bytes,
                                  temp_bytes)

    cost = pl.CostEstimate(
        flops=2 * N * HW * hid * (2 * C + 12),
        transcendentals=N * HW * hid,
        bytes_accessed=N * C * HW * (in_isz + out_isz)
        + (w0_c.size + w1_c.size) * in_isz + (cp.size + b1_c.size) * 4,
    )

    kernel = functools.partial(_adaptive_lfe_kernel, H=H, W=W,
                               pad_off=pad_off, approx_gelu=approximate_gelu)
    full = lambda a: pl.BlockSpec(a.shape, lambda n: (0,) * a.ndim)

    out_flat = pl.pallas_call(
        kernel,
        out_shape=jax.ShapeDtypeStruct((N, C, HW), x_nchw.dtype),
        grid=(N // Bt,),
        in_specs=[
            pl.BlockSpec((Bt, C, HW), lambda n: (n, 0, 0)),  # x (lane-dense)
            full(w0_c),   # (hid, C)
            full(cp),     # (hid, 11) packed per-channel params
            full(w1_c),   # (C, hid)
            full(b1_c),   # (C, 1)
        ],
        out_specs=pl.BlockSpec((Bt, C, HW), lambda n: (n, 0, 0)),
        scratch_shapes=[pltpu.VMEM((hid, padw), jnp.float32)
                        for _ in range(3)],
        compiler_params=pltpu.CompilerParams(
            dimension_semantics=("parallel",),
            vmem_limit_bytes=vmem_limit),
        cost_estimate=cost,
    )(x_flat, w0_c, cp, w1_c, b1_c)

    return out_flat.reshape(N, C, H, W)


def init_params(key, dim, growth_rate=2.0):
    hid = int(dim * growth_rate)
    ks = jax.random.split(key, 6)
    # conv_0: PyTorch weight (hid, dim, 1, 1) -> stored (hid, dim)
    w0 = jax.random.normal(ks[0], (hid, dim), jnp.float32) * 0.1
    b0 = jax.random.normal(ks[1], (hid,), jnp.float32) * 0.01
    # adaptive_conv (depthwise): PyTorch weight (hid, 1, 3, 3) -> (hid, 3, 3)
    w3 = jax.random.normal(ks[2], (hid, 3, 3), jnp.float32) * 0.1
    b3 = jax.random.normal(ks[3], (hid,), jnp.float32) * 0.01
    # alpha = ones, beta = zeros (module __init__ values)
    alpha = jnp.ones((hid,), jnp.float32)
    beta = jnp.zeros((hid,), jnp.float32)
    # conv_1: PyTorch weight (dim, hid, 1, 1) -> stored (dim, hid)
    w1 = jax.random.normal(ks[4], (dim, hid), jnp.float32) * 0.1
    b1 = jax.random.normal(ks[5], (dim,), jnp.float32) * 0.01
    return (w0, b0, w3, b3, alpha, beta, w1, b1)


def _reference(x_nchw, params):
    """Pure-JAX reference (NCHW) for a sanity check."""
    w0, b0, w3, b3, alpha, beta, w1, b1 = params
    N, C, H, W = x_nchw.shape
    h = jnp.einsum('nchw,fc->nfhw', x_nchw, w0) + b0[None, :, None, None]
    hp = jnp.pad(h, ((0, 0), (0, 0), (1, 1), (1, 1)))
    acc = jnp.zeros_like(h)
    for ki in range(3):
        for kj in range(3):
            acc = acc + hp[:, :, ki:ki + H, kj:kj + W] \
                * w3[None, :, ki, kj, None, None]
    acc = acc + b3[None, :, None, None]
    y = acc * alpha[None, :, None, None] + beta[None, :, None, None]
    g = jax.nn.gelu(y, approximate=False)
    out = jnp.einsum('nfhw,cf->nchw', g, w1) + b1[None, :, None, None]
    return out


if __name__ == "__main__":
    dim, growth = 4, 2.0
    N, H, W = 2, 16, 16

    key = jax.random.PRNGKey(0)
    kx, kp, ka, kb = jax.random.split(key, 4)
    x = jax.random.normal(kx, (N, dim, H, W), jnp.float32)

    p = list(init_params(kp, dim, growth))
    hid = p[0].shape[0]
    # Perturb alpha/beta away from the ones/zeros init so the folded-affine
    # path is genuinely exercised.
    p[4] = 1.0 + 0.1 * jax.random.normal(ka, (hid,), jnp.float32)   # alpha
    p[5] = 0.05 * jax.random.normal(kb, (hid,), jnp.float32)        # beta
    params = tuple(p)

    ref = _reference(x, params)

    # Default f32 / exact-GELU path: tight parity with the PyTorch semantics.
    out = adaptive_lfe(x, params)
    jax.block_until_ready(out)
    assert out.shape == (N, dim, H, W)
    err = float(jnp.max(jnp.abs(out - ref)))
    assert jnp.allclose(out, ref, atol=1e-5, rtol=1e-5), err

    # bf16-matmul path (f32 accumulation): looser tolerance by construction.
    out_bf16 = adaptive_lfe(x, params, use_bf16_matmul=True)
    jax.block_until_ready(out_bf16)
    err_bf16 = float(jnp.max(jnp.abs(out_bf16 - ref)))
    assert jnp.allclose(out_bf16, ref, atol=5e-2, rtol=5e-2), err_bf16

    print("KERNEL_OK")
</pallas_src>

<mosaic_0001>
module attributes {stable_mosaic.version = 11 : i64} {
  func.func @_adaptive_lfe_kernel(%arg0: i32, %arg1: memref<1x4x256xf32, #tpu.memory_space<vmem>>, %arg2: memref<8x4xf32, #tpu.memory_space<vmem>>, %arg3: memref<8x11xf32, #tpu.memory_space<vmem>>, %arg4: memref<4x8xf32, #tpu.memory_space<vmem>>, %arg5: memref<4x1xf32, #tpu.memory_space<vmem>>, %arg6: memref<1x4x256xf32, #tpu.memory_space<vmem>>, %arg7: memref<8x512xf32, #tpu.memory_space<vmem>>, %arg8: memref<8x512xf32, #tpu.memory_space<vmem>>, %arg9: memref<8x512xf32, #tpu.memory_space<vmem>>) attributes {dimension_semantics = [#tpu.dimension_semantics<parallel>], iteration_bounds = array<i64: 2>, scalar_prefetch = 0 : i64, scratch_operands = 3 : i64, tpu.core_type = #tpu.core_type<tc>, window_params = [{transform_indices = @transform_0, window_bounds = array<i64: 1, 4, 256>}, {pipeline_mode = #tpu.pipeline_mode<synchronous>, transform_indices = @transform_1, window_bounds = array<i64: 8, 4>}, {pipeline_mode = #tpu.pipeline_mode<synchronous>, transform_indices = @transform_2, window_bounds = array<i64: 8, 11>}, {pipeline_mode = #tpu.pipeline_mode<synchronous>, transform_indices = @transform_3, window_bounds = array<i64: 4, 8>}, {pipeline_mode = #tpu.pipeline_mode<synchronous>, transform_indices = @transform_4, window_bounds = array<i64: 4, 1>}, {transform_indices = @transform_5, window_bounds = array<i64: 1, 4, 256>}]} {
    %c0 = arith.constant 0 : index
    %c0_0 = arith.constant 0 : index
    %0 = vector.load %arg3[%c0, %c0_0] : memref<8x11xf32, #tpu.memory_space<vmem>>, vector<8x9xf32>
    %c0_1 = arith.constant 0 : index
    %c9 = arith.constant 9 : index
    %1 = vector.load %arg3[%c0_1, %c9] : memref<8x11xf32, #tpu.memory_space<vmem>>, vector<8x1xf32>
    %c0_2 = arith.constant 0 : index
    %c10 = arith.constant 10 : index
    %2 = vector.load %arg3[%c0_2, %c10] : memref<8x11xf32, #tpu.memory_space<vmem>>, vector<8x1xf32>
    %3 = tpu.iota {dimensions = array<i32: 1>} : vector<1x256xi32>
    %c16_i32 = arith.constant 16 : i32
    %c0_i32 = arith.constant 0 : i32
    %4 = arith.cmpi eq, %c16_i32, %c0_i32 : i32
    %c1_i32 = arith.constant 1 : i32
    %5 = arith.select %4, %c1_i32, %c16_i32 : i32
    %6 = vector.broadcast %5 : i32 to vector<1x256xi32>
    %7 = arith.remsi %3, %6 : vector<1x256xi32>
    %c0_i32_3 = arith.constant 0 : i32
    %8 = vector.broadcast %c0_i32_3 : i32 to vector<1x256xi32>
    %9 = arith.cmpi ne, %7, %8 : vector<1x256xi32>
    %c0_i32_4 = arith.constant 0 : i32
    %10 = vector.broadcast %c0_i32_4 : i32 to vector<1x256xi32>
    %11 = arith.cmpi slt, %7, %10 : vector<1x256xi32>
    %c0_i32_5 = arith.constant 0 : i32
    %12 = arith.cmpi slt, %5, %c0_i32_5 : i32
    %13 = vector.broadcast %12 : i1 to vector<1x256xi1>
    %14 = vector.broadcast %13 : vector<1x256xi1> to vector<1x256xi1>
    %15 = arith.xori %11, %14 : vector<1x256xi1>
    %16 = arith.andi %15, %9 : vector<1x256xi1>
    %17 = vector.broadcast %5 : i32 to vector<1x256xi32>
    %18 = arith.addi %7, %17 : vector<1x256xi32>
    %19 = arith.select %16, %18, %7 : vector<1x256xi1>, vector<1x256xi32>
    %c0_i32_6 = arith.constant 0 : i32
    %20 = vector.broadcast %c0_i32_6 : i32 to vector<1x256xi32>
    %21 = arith.cmpi ne, %19, %20 : vector<1x256xi32>
    %c15_i32 = arith.constant 15 : i32
    %22 = vector.broadcast %c15_i32 : i32 to vector<1x256xi32>
    %23 = arith.cmpi ne, %19, %22 : vector<1x256xi32>
    %cst = arith.constant 0.000000e+00 : f32
    %24 = vector.broadcast %cst : f32 to vector<8x128xf32>
    %c0_7 = arith.constant 0 : index
    %c0_8 = arith.constant 0 : index
    %25 = vector.load %arg7[%c0_7, %c0_8] : memref<8x512xf32, #tpu.memory_space<vmem>>, vector<8x128xf32>
    tpu.vector_store %arg7[%c0_7, %c0_8], %24 {strides = array<i32>} : memref<8x512xf32, #tpu.memory_space<vmem>>, vector<8x128xf32>,
    %c0_9 = arith.constant 0 : index
    %c384 = arith.constant 384 : index
    %26 = vector.load %arg7[%c0_9, %c384] : memref<8x512xf32, #tpu.memory_space<vmem>>, vector<8x128xf32>
    tpu.vector_store %arg7[%c0_9, %c384], %24 {strides = array<i32>} : memref<8x512xf32, #tpu.memory_space<vmem>>, vector<8x128xf32>,
    %c0_10 = arith.constant 0 : index
    %c0_11 = arith.constant 0 : index
    %27 = vector.load %arg8[%c0_10, %c0_11] : memref<8x512xf32, #tpu.memory_space<vmem>>, vector<8x128xf32>
    tpu.vector_store %arg8[%c0_10, %c0_11], %24 {strides = array<i32>} : memref<8x512xf32, #tpu.memory_space<vmem>>, vector<8x128xf32>,
    %c0_12 = arith.constant 0 : index
    %c384_13 = arith.constant 384 : index
    %28 = vector.load %arg8[%c0_12, %c384_13] : memref<8x512xf32, #tpu.memory_space<vmem>>, vector<8x128xf32>
    tpu.vector_store %arg8[%c0_12, %c384_13], %24 {strides = array<i32>} : memref<8x512xf32, #tpu.memory_space<vmem>>, vector<8x128xf32>,
    %c0_14 = arith.constant 0 : index
    %c0_15 = arith.constant 0 : index
    %29 = vector.load %arg9[%c0_14, %c0_15] : memref<8x512xf32, #tpu.memory_space<vmem>>, vector<8x128xf32>
    tpu.vector_store %arg9[%c0_14, %c0_15], %24 {strides = array<i32>} : memref<8x512xf32, #tpu.memory_space<vmem>>, vector<8x128xf32>,
    %c0_16 = arith.constant 0 : index
    %c384_17 = arith.constant 384 : index
    %30 = vector.load %arg9[%c0_16, %c384_17] : memref<8x512xf32, #tpu.memory_space<vmem>>, vector<8x128xf32>
    tpu.vector_store %arg9[%c0_16, %c384_17], %24 {strides = array<i32>} : memref<8x512xf32, #tpu.memory_space<vmem>>, vector<8x128xf32>,
    %c0_18 = arith.constant 0 : index
    %c0_19 = arith.constant 0 : index
    %31 = vector.load %arg2[%c0_18, %c0_19] : memref<8x4xf32, #tpu.memory_space<vmem>>, vector<8x4xf32>
    %c0_20 = arith.constant 0 : index
    %c0_21 = arith.constant 0 : index
    %32 = vector.load %arg4[%c0_20, %c0_21] : memref<4x8xf32, #tpu.memory_space<vmem>>, vector<4x8xf32>
    %c0_22 = arith.constant 0 : index
    %c0_23 = arith.constant 0 : index
    %33 = vector.load %arg5[%c0_22, %c0_23] : memref<4x1xf32, #tpu.memory_space<vmem>>, vector<4x1xf32>
    %c0_24 = arith.constant 0 : index
    %c0_25 = arith.constant 0 : index
    %c0_26 = arith.constant 0 : index
    %34 = vector.load %arg1[%c0_24, %c0_25, %c0_26] : memref<1x4x256xf32, #tpu.memory_space<vmem>>, vector<1x4x256xf32>
    %35 = vector.shape_cast %34 : vector<1x4x256xf32> to vector<4x256xf32>
    %cst_27 = arith.constant dense<0.000000e+00> : vector<8x256xf32>
    %36 = tpu.matmul %31, %35, %cst_27 {dimension_numbers = #tpu.dot_dimension_numbers<[1], [0], [0], [1], [0, 0, 1, 1], [], []>} : vector<8x4xf32>, vector<4x256xf32>, vector<8x256xf32> -> vector<8x256xf32>
    %37 = vector.broadcast %1 : vector<8x1xf32> to vector<8x256xf32>
    %38 = arith.addf %36, %37 : vector<8x256xf32>
    %c1_i32_28 = arith.constant 1 : i32
    %39 = tpu.dynamic_rotate %38 by %c1_i32_28 dim 1 : vector<8x256xf32>, i32 -> vector<8x256xf32>
    %cst_29 = arith.constant 0.000000e+00 : f32
    %40 = vector.shape_cast %21 : vector<1x256xi1> to vector<1x256xi1>
    %41 = vector.broadcast %40 : vector<1x256xi1> to vector<8x256xi1>
    %42 = vector.broadcast %cst_29 : f32 to vector<8x256xf32>
    %43 = arith.select %41, %39, %42 : vector<8x256xi1>, vector<8x256xf32>
    %c255_i32 = arith.constant 255 : i32
    %44 = tpu.dynamic_rotate %38 by %c255_i32 dim 1 : vector<8x256xf32>, i32 -> vector<8x256xf32>
    %cst_30 = arith.constant 0.000000e+00 : f32
    %45 = vector.shape_cast %23 : vector<1x256xi1> to vector<1x256xi1>
    %46 = vector.broadcast %45 : vector<1x256xi1> to vector<8x256xi1>
    %47 = vector.broadcast %cst_30 : f32 to vector<8x256xf32>
    %48 = arith.select %46, %44, %47 : vector<8x256xi1>, vector<8x256xf32>
    %c0_31 = arith.constant 0 : index
    %c128 = arith.constant 128 : index
    %49 = vector.load %arg7[%c0_31, %c128] : memref<8x512xf32, #tpu.memory_space<vmem>>, vector<8x256xf32>
    tpu.vector_store %arg7[%c0_31, %c128], %43 {strides = array<i32>} : memref<8x512xf32, #tpu.memory_space<vmem>>, vector<8x256xf32>,
    %c0_32 = arith.constant 0 : index
    %c128_33 = arith.constant 128 : index
    %50 = vector.load %arg8[%c0_32, %c128_33] : memref<8x512xf32, #tpu.memory_space<vmem>>, vector<8x256xf32>
    tpu.vector_store %arg8[%c0_32, %c128_33], %38 {strides = array<i32>} : memref<8x512xf32, #tpu.memory_space<vmem>>, vector<8x256xf32>,
    %c0_34 = arith.constant 0 : index
    %c128_35 = arith.constant 128 : index
    %51 = vector.load %arg9[%c0_34, %c128_35] : memref<8x512xf32, #tpu.memory_space<vmem>>, vector<8x256xf32>
    tpu.vector_store %arg9[%c0_34, %c128_35], %48 {strides = array<i32>} : memref<8x512xf32, #tpu.memory_space<vmem>>, vector<8x256xf32>,
    %c0_36 = arith.constant 0 : index
    %c112 = arith.constant 112 : index
    %52 = vector.load %arg7[%c0_36, %c112] : memref<8x512xf32, #tpu.memory_space<vmem>>, vector<8x256xf32>
    %53 = vector.extract_strided_slice %0 {offsets = [0, 0], sizes = [8, 1], strides = [1, 1]} : vector<8x9xf32> to vector<8x1xf32>
    %54 = vector.broadcast %53 : vector<8x1xf32> to vector<8x256xf32>
    %55 = arith.mulf %52, %54 : vector<8x256xf32>
    %c0_37 = arith.constant 0 : index
    %c112_38 = arith.constant 112 : index
    %56 = vector.load %arg8[%c0_37, %c112_38] : memref<8x512xf32, #tpu.memory_space<vmem>>, vector<8x256xf32>
    %57 = vector.extract_strided_slice %0 {offsets = [0, 1], sizes = [8, 1], strides = [1, 1]} : vector<8x9xf32> to vector<8x1xf32>
    %58 = vector.broadcast %57 : vector<8x1xf32> to vector<8x256xf32>
    %59 = arith.mulf %56, %58 : vector<8x256xf32>
    %60 = arith.addf %55, %59 : vector<8x256xf32>
    %c0_39 = arith.constant 0 : index
    %c112_40 = arith.constant 112 : index
    %61 = vector.load %arg9[%c0_39, %c112_40] : memref<8x512xf32, #tpu.memory_space<vmem>>, vector<8x256xf32>
    %62 = vector.extract_strided_slice %0 {offsets = [0, 2], sizes = [8, 1], strides = [1, 1]} : vector<8x9xf32> to vector<8x1xf32>
    %63 = vector.broadcast %62 : vector<8x1xf32> to vector<8x256xf32>
    %64 = arith.mulf %61, %63 : vector<8x256xf32>
    %65 = arith.addf %60, %64 : vector<8x256xf32>
    %66 = vector.extract_strided_slice %0 {offsets = [0, 3], sizes = [8, 1], strides = [1, 1]} : vector<8x9xf32> to vector<8x1xf32>
    %67 = vector.broadcast %66 : vector<8x1xf32> to vector<8x256xf32>
    %68 = arith.mulf %43, %67 : vector<8x256xf32>
    %69 = arith.addf %65, %68 : vector<8x256xf32>
    %70 = vector.extract_strided_slice %0 {offsets = [0, 4], sizes = [8, 1], strides = [1, 1]} : vector<8x9xf32> to vector<8x1xf32>
    %71 = vector.broadcast %70 : vector<8x1xf32> to vector<8x256xf32>
    %72 = arith.mulf %38, %71 : vector<8x256xf32>
    %73 = arith.addf %69, %72 : vector<8x256xf32>
    %74 = vector.extract_strided_slice %0 {offsets = [0, 5], sizes = [8, 1], strides = [1, 1]} : vector<8x9xf32> to vector<8x1xf32>
    %75 = vector.broadcast %74 : vector<8x1xf32> to vector<8x256xf32>
    %76 = arith.mulf %48, %75 : vector<8x256xf32>
    %77 = arith.addf %73, %76 : vector<8x256xf32>
    %c0_41 = arith.constant 0 : index
    %c144 = arith.constant 144 : index
    %78 = vector.load %arg7[%c0_41, %c144] : memref<8x512xf32, #tpu.memory_space<vmem>>, vector<8x256xf32>
    %79 = vector.extract_strided_slice %0 {offsets = [0, 6], sizes = [8, 1], strides = [1, 1]} : vector<8x9xf32> to vector<8x1xf32>
    %80 = vector.broadcast %79 : vector<8x1xf32> to vector<8x256xf32>
    %81 = arith.mulf %78, %80 : vector<8x256xf32>
    %82 = arith.addf %77, %81 : vector<8x256xf32>
    %c0_42 = arith.constant 0 : index
    %c144_43 = arith.constant 144 : index
    %83 = vector.load %arg8[%c0_42, %c144_43] : memref<8x512xf32, #tpu.memory_space<vmem>>, vector<8x256xf32>
    %84 = vector.extract_strided_slice %0 {offsets = [0, 7], sizes = [8, 1], strides = [1, 1]} : vector<8x9xf32> to vector<8x1xf32>
    %85 = vector.broadcast %84 : vector<8x1xf32> to vector<8x256xf32>
    %86 = arith.mulf %83, %85 : vector<8x256xf32>
    %87 = arith.addf %82, %86 : vector<8x256xf32>
    %c0_44 = arith.constant 0 : index
    %c144_45 = arith.constant 144 : index
    %88 = vector.load %arg9[%c0_44, %c144_45] : memref<8x512xf32, #tpu.memory_space<vmem>>, vector<8x256xf32>
    %89 = vector.extract_strided_slice %0 {offsets = [0, 8], sizes = [8, 1], strides = [1, 1]} : vector<8x9xf32> to vector<8x1xf32>
    %90 = vector.broadcast %89 : vector<8x1xf32> to vector<8x256xf32>
    %91 = arith.mulf %88, %90 : vector<8x256xf32>
    %92 = arith.addf %87, %91 : vector<8x256xf32>
    %93 = vector.broadcast %2 : vector<8x1xf32> to vector<8x256xf32>
    %94 = arith.addf %92, %93 : vector<8x256xf32>
    %cst_46 = arith.constant 5.000000e-01 : f32
    %95 = vector.broadcast %cst_46 : f32 to vector<8x256xf32>
    %96 = arith.mulf %95, %94 : vector<8x256xf32>
    %cst_47 = arith.constant 0.707106769 : f32
    %97 = vector.broadcast %cst_47 : f32 to vector<8x256xf32>
    %98 = arith.mulf %94, %97 : vector<8x256xf32>
    %99 = math.erf %98 : vector<8x256xf32>
    %cst_48 = arith.constant 1.000000e+00 : f32
    %100 = vector.broadcast %cst_48 : f32 to vector<8x256xf32>
    %101 = arith.addf %100, %99 : vector<8x256xf32>
    %102 = arith.mulf %96, %101 : vector<8x256xf32>
    %cst_49 = arith.constant dense<0.000000e+00> : vector<4x256xf32>
    %103 = tpu.matmul %32, %102, %cst_49 {dimension_numbers = #tpu.dot_dimension_numbers<[1], [0], [0], [1], [0, 0, 1, 1], [], []>} : vector<4x8xf32>, vector<8x256xf32>, vector<4x256xf32> -> vector<4x256xf32>
    %104 = vector.broadcast %33 : vector<4x1xf32> to vector<4x256xf32>
    %105 = arith.addf %103, %104 : vector<4x256xf32>
    %c0_50 = arith.constant 0 : index
    %c0_51 = arith.constant 0 : index
    %c0_52 = arith.constant 0 : index
    %106 = vector.load %arg6[%c0_50, %c0_51, %c0_52] : memref<1x4x256xf32, #tpu.memory_space<vmem>>, vector<1x4x256xf32>
    %107 = vector.shape_cast %106 : vector<1x4x256xf32> to vector<4x256xf32>
    %108 = vector.shape_cast %105 : vector<4x256xf32> to vector<1x4x256xf32>
    tpu.vector_store %arg6[%c0_50, %c0_51, %c0_52], %108 {strides = array<i32>} : memref<1x4x256xf32, #tpu.memory_space<vmem>>, vector<1x4x256xf32>,
    return
  }
  func.func @transform_0(%arg0: i32) -> (i32, i32, i32) {
    %c0_i32 = arith.constant 0 : i32
    %c0_i32_0 = arith.constant 0 : i32
    %c0_i32_1 = arith.constant 0 : i32
    return %arg0, %c0_i32, %c0_i32_0 : i32, i32, i32
  }
  func.func @transform_1(%arg0: i32) -> (i32, i32) {
    %c0_i32 = arith.constant 0 : i32
    %c0_i32_0 = arith.constant 0 : i32
    %c0_i32_1 = arith.constant 0 : i32
    return %c0_i32, %c0_i32_0 : i32, i32
  }
  func.func @transform_2(%arg0: i32) -> (i32, i32) {
    %c0_i32 = arith.constant 0 : i32
    %c0_i32_0 = arith.constant 0 : i32
    %c0_i32_1 = arith.constant 0 : i32
    return %c0_i32, %c0_i32_0 : i32, i32
  }
  func.func @transform_3(%arg0: i32) -> (i32, i32) {
    %c0_i32 = arith.constant 0 : i32
    %c0_i32_0 = arith.constant 0 : i32
    %c0_i32_1 = arith.constant 0 : i32
    return %c0_i32, %c0_i32_0 : i32, i32
  }
  func.func @transform_4(%arg0: i32) -> (i32, i32) {
    %c0_i32 = arith.constant 0 : i32
    %c0_i32_0 = arith.constant 0 : i32
    %c0_i32_1 = arith.constant 0 : i32
    return %c0_i32, %c0_i32_0 : i32, i32
  }
  func.func @transform_5(%arg0: i32) -> (i32, i32, i32) {
    %c0_i32 = arith.constant 0 : i32
    %c0_i32_0 = arith.constant 0 : i32
    %c0_i32_1 = arith.constant 0 : i32
    return %arg0, %c0_i32, %c0_i32_0 : i32, i32, i32
  }
}

</mosaic_0001>

<llo_original>
// kernel: adaptive_lfe.1
$region0: #{adaptive_lfe.1}
  #allocation0 [shape = 'u32[]', space=smem, size = 0x4, offset = 0x4, fixed_abs, tag = 'smem constant byte address 0x4 - core index']
  #allocation1 [shape = 'u32[144,128]{1,0:T(1,128)}', space=vmem, size = 0x12000, scoped, tag = 'internal scratch']
  #allocation2 [shape = 'f32[8,512]{1,0:T(8,128)}', space=vmem, size = 0x4000, scoped, tag = 'scratch operand']
  #allocation3 [shape = 'f32[8,512]{1,0:T(8,128)}', space=vmem, size = 0x4000, scoped, tag = 'scratch operand']
  #allocation4 [shape = 'f32[8,512]{1,0:T(8,128)}', space=vmem, size = 0x4000, scoped, tag = 'scratch operand']
  %s0 = inlined_call_operand.vmem [shape: f32[2,4,256], index: 0, kind: input, shape index: {}]
  %s1 = inlined_call_operand.vmem [shape: f32[8,4], index: 1, kind: input, shape index: {}]
  %s2 = inlined_call_operand.vmem [shape: f32[8,11], index: 2, kind: input, shape index: {}]
  %s3 = inlined_call_operand.vmem [shape: f32[4,8], index: 3, kind: input, shape index: {}]
  %s4 = inlined_call_operand.vmem [shape: f32[4,1], index: 4, kind: input, shape index: {}]
  %s5 = inlined_call_operand.vmem [shape: f32[2,4,256], index: 5, kind: output, shape index: {}]
  %s6 = sld [smem:[#allocation0]]
  $region53: #{adaptive_lfe.1} parent=0
    _
  %s8 = ssub.s32 1, %s6
  %s9 = scalar_select 0, %s8, %s6
  loop: start=0, step=1, limit=4
  $region2: #{adaptive_lfe.1} parent=0 // loop_pre_header
    _
  $region3: #{adaptive_lfe.1} parent=0 // loop_header
    %s11 = sphi 0, %s15
    %p12 = scmp.ge.s32.totalorder %s11, 4
    %s21 = sphi 0, %s23
    %s24 = sphi 0, %s21
    %s25 = sphi 0, %s24
    %s41 = sphi 0, %s25
    %s45 = sphi 0, %s45
    %s47 = sphi 0, %s45
    %s48 = sphi 0, %s47
    %s62 = sphi 0, %s48
    %s66 = sphi 0, %s66
    %s68 = sphi 0, %s66
    %s69 = sphi 0, %s68
    %s83 = sphi 0, %s69
    %s87 = sphi 0, %s87
    %s89 = sphi 0, %s87
    %s90 = sphi 0, %s89
    %s104 = sphi 0, %s90
    %s108 = sphi 0, %s108
    %s110 = sphi 0, %s108
    %s111 = sphi 0, %s110
    %s125 = sphi 0, %s111
    %s131 = sphi 0, %s133
    %s134 = sphi 0, %s131
    %s135 = sphi 0, %s134
    %s151 = sphi 0, %s135
  $region4: #{adaptive_lfe.1} parent=0 // loop_header_branch
    %14 = sbr.rel (%p12) target = $region8
  $region5: #{adaptive_lfe.1} parent=0 // loop_body
    %s16 = ssub.s32 %s11, 1
    %s17 = ssub.s32 %s11, 2
    %s18 = sadd.s32 %s11, 1
    %s19 = ssub.s32 %s11, %s18
    %p20 = scmp.eq.s32.totalorder %s19, 0
    %s22 = sadd.s32 %s21, 1
    %s23 = scalar_select %p20, %s21, %s22
    %p26 = pneg %p20
    %p27 = scmp.eq.s32.totalorder %s11, 1
    %p28 = por %p26, %p27
    %p29 = scmp.ne.s32.totalorder %s21, %s24
    %p30 = scmp.eq.s32.totalorder %s11, 0
    %p31 = por %p29, %p30
    %p32 = scmp.ne.s32.totalorder %s21, %s24
    %p33 = scmp.eq.s32.totalorder %s16, 1
    %p34 = por %p32, %p33
    %p35 = scmp.ne.s32.totalorder %s24, %s25
    %p36 = scmp.eq.s32.totalorder %s16, 0
    %p37 = por %p35, %p36
    %p38 = scmp.ne.s32.totalorder %s24, %s25
    %p39 = scmp.eq.s32.totalorder %s17, 1
    %p40 = por %p38, %p39
    %p42 = scmp.ne.s32.totalorder %s25, %s41
    %p43 = scmp.eq.s32.totalorder %s17, 0
    %p44 = por %p42, %p43
    %s46 = sadd.s32 %s45, 1
    %p49 = scmp.eq.s32.totalorder %s11, 1
    %p50 = scmp.ne.s32.totalorder %s45, %s47
    %p51 = scmp.eq.s32.totalorder %s11, 0
    %p52 = por %p50, %p51
    %p53 = scmp.ne.s32.totalorder %s45, %s47
    %p54 = scmp.eq.s32.totalorder %s16, 1
    %p55 = por %p53, %p54
    %p56 = scmp.ne.s32.totalorder %s47, %s48
    %p57 = scmp.eq.s32.totalorder %s16, 0
    %p58 = por %p56, %p57
    %p59 = scmp.ne.s32.totalorder %s47, %s48
    %p60 = scmp.eq.s32.totalorder %s17, 1
    %p61 = por %p59, %p60
    %p63 = scmp.ne.s32.totalorder %s48, %s62
    %p64 = scmp.eq.s32.totalorder %s17, 0
    %p65 = por %p63, %p64
    %s67 = sadd.s32 %s66, 1
    %p70 = scmp.eq.s32.totalorder %s11, 1
    %p71 = scmp.ne.s32.totalorder %s66, %s68
    %p72 = scmp.eq.s32.totalorder %s11, 0
    %p73 = por %p71, %p72
    %p74 = scmp.ne.s32.totalorder %s66, %s68
    %p75 = scmp.eq.s32.totalorder %s16, 1
    %p76 = por %p74, %p75
    %p77 = scmp.ne.s32.totalorder %s68, %s69
    %p78 = scmp.eq.s32.totalorder %s16, 0
    %p79 = por %p77, %p78
    %p80 = scmp.ne.s32.totalorder %s68, %s69
    %p81 = scmp.eq.s32.totalorder %s17, 1
    %p82 = por %p80, %p81
    %p84 = scmp.ne.s32.totalorder %s69, %s83
    %p85 = scmp.eq.s32.totalorder %s17, 0
    %p86 = por %p84, %p85
    %s88 = sadd.s32 %s87, 1
    %p91 = scmp.eq.s32.totalorder %s11, 1
    %p92 = scmp.ne.s32.totalorder %s87, %s89
    %p93 = scmp.eq.s32.totalorder %s11, 0
    %p94 = por %p92, %p93
    %p95 = scmp.ne.s32.totalorder %s87, %s89
    %p96 = scmp.eq.s32.totalorder %s16, 1
    %p97 = por %p95, %p96
    %p98 = scmp.ne.s32.totalorder %s89, %s90
    %p99 = scmp.eq.s32.totalorder %s16, 0
    %p100 = por %p98, %p99
    %p101 = scmp.ne.s32.totalorder %s89, %s90
    %p102 = scmp.eq.s32.totalorder %s17, 1
    %p103 = por %p101, %p102
    %p105 = scmp.ne.s32.totalorder %s90, %s104
    %p106 = scmp.eq.s32.totalorder %s17, 0
    %p107 = por %p105, %p106
    %s109 = sadd.s32 %s108, 1
    %p112 = scmp.eq.s32.totalorder %s11, 1
    %p113 = scmp.ne.s32.totalorder %s108, %s110
    %p114 = scmp.eq.s32.totalorder %s11, 0
    %p115 = por %p113, %p114
    %p116 = scmp.ne.s32.totalorder %s108, %s110
    %p117 = scmp.eq.s32.totalorder %s16, 1
    %p118 = por %p116, %p117
    %p119 = scmp.ne.s32.totalorder %s110, %s111
    %p120 = scmp.eq.s32.totalorder %s16, 0
    %p121 = por %p119, %p120
    %p122 = scmp.ne.s32.totalorder %s110, %s111
    %p123 = scmp.eq.s32.totalorder %s17, 1
    %p124 = por %p122, %p123
    %p126 = scmp.ne.s32.totalorder %s111, %s125
    %p127 = scmp.eq.s32.totalorder %s17, 0
    %p128 = por %p126, %p127
    %s129 = ssub.s32 %s11, %s18
    %p130 = scmp.eq.s32.totalorder %s129, 0
    %s132 = sadd.s32 %s131, 1
    %s133 = scalar_select %p130, %s131, %s132
    %p136 = pneg %p130
    %p137 = scmp.eq.s32.totalorder %s11, 1
    %p138 = por %p136, %p137
    %p139 = scmp.ne.s32.totalorder %s131, %s134
    %p140 = scmp.eq.s32.totalorder %s11, 0
    %p141 = por %p139, %p140
    %p142 = scmp.ne.s32.totalorder %s131, %s134
    %p143 = scmp.eq.s32.totalorder %s16, 1
    %p144 = por %p142, %p143
    %p145 = scmp.ne.s32.totalorder %s134, %s135
    %p146 = scmp.eq.s32.totalorder %s16, 0
    %p147 = por %p145, %p146
    %p148 = scmp.ne.s32.totalorder %s134, %s135
    %p149 = scmp.eq.s32.totalorder %s17, 1
    %p150 = por %p148, %p149
    %p152 = scmp.ne.s32.totalorder %s135, %s151
    %p153 = scmp.eq.s32.totalorder %s17, 0
    %p154 = por %p152, %p153
    %p155 = scmp.le.s32.totalorder 1, %s11
    %p156 = scmp.lt.s32.totalorder %s11, 3
    %p157 = pnand %p155, %p156
    %p158 = pneg %p157
    // Predicated region
    $region9: #{adaptive_lfe.1} parent=5 // pred_check
      _
    $region10: #{adaptive_lfe.1} parent=5 // pred_check_branch
      %160 = sbr.rel (%p157) target = $region12
    $region11: #{adaptive_lfe.1} parent=5 // pred_region
      %s161 = ssub.s32 %s11, 1
      // Predicated region
      $region13: #{adaptive_lfe.1} parent=11 // pred_check
        %p162 = pneg %p58
      $region14: #{adaptive_lfe.1} parent=11 // pred_check_branch
        %164 = sbr.rel (%p162) target = $region16
      $region15: #{adaptive_lfe.1} parent=11 // pred_region
        _
      $region16: #{adaptive_lfe.1} parent=11 // pred_fallthru
        _
      // Predicated region
      $region17: #{adaptive_lfe.1} parent=11 // pred_check
        %p165 = pneg %p79
      $region18: #{adaptive_lfe.1} parent=11 // pred_check_branch
        %167 = sbr.rel (%p165) target = $region20
      $region19: #{adaptive_lfe.1} parent=11 // pred_region
        _
      $region20: #{adaptive_lfe.1} parent=11 // pred_fallthru
        _
      // Predicated region
      $region21: #{adaptive_lfe.1} parent=11 // pred_check
        %p168 = pneg %p100
      $region22: #{adaptive_lfe.1} parent=11 // pred_check_branch
        %170 = sbr.rel (%p168) target = $region24
      $region23: #{adaptive_lfe.1} parent=11 // pred_region
        _
      $region24: #{adaptive_lfe.1} parent=11 // pred_fallthru
        _
      // Predicated region
      $region25: #{adaptive_lfe.1} parent=11 // pred_check
        %p171 = pneg %p121
      $region26: #{adaptive_lfe.1} parent=11 // pred_check_branch
        %173 = sbr.rel (%p171) target = $region28
      $region27: #{adaptive_lfe.1} parent=11 // pred_region
        _
      $region28: #{adaptive_lfe.1} parent=11 // pred_fallthru
        _
    $region12: #{adaptive_lfe.1} parent=5 // pred_fallthru
      _
    %p174 = scmp.lt.s32.totalorder %s11, 2
    // Predicated region
    $region29: #{adaptive_lfe.1} parent=5 // pred_check
      %p175 = pneg %p174
    $region30: #{adaptive_lfe.1} parent=5 // pred_check_branch
      %177 = sbr.rel (%p175) target = $region32
    $region31: #{adaptive_lfe.1} parent=5 // pred_region
      // Predicated region
      $region33: #{adaptive_lfe.1} parent=31 // pred_check
        %p178 = pneg %p31
      $region34: #{adaptive_lfe.1} parent=31 // pred_check_branch
        %180 = sbr.rel (%p178) target = $region36
      $region35: #{adaptive_lfe.1} parent=31 // pred_region
        %p181 = scmp.lt.s32.totalorder %s11, 1
        %s182 = scalar_select %p181, %s11, 1
        %s183 = smul.addr %s182, 2
        %s184 = smul.addr %s183, 4
        %s185 = scalar_lea.vmem %s0, %s184
      $region36: #{adaptive_lfe.1} parent=31 // pred_fallthru
        _
    $region32: #{adaptive_lfe.1} parent=5 // pred_fallthru
      _
    %p186 = scmp.le.s32.totalorder 1, %s11
    %p187 = scmp.lt.s32.totalorder %s11, 3
    %p188 = pnand %p186, %p187
    %p189 = pneg %p188
    // Predicated region
    $region37: #{adaptive_lfe.1} parent=5 // pred_check
      _
    $region38: #{adaptive_lfe.1} parent=5 // pred_check_branch
      %191 = sbr.rel (%p188) target = $region40
    $region39: #{adaptive_lfe.1} parent=5 // pred_region
      %s192 = ssub.s32 %s11, 1
      %p193 = scmp.lt.s32.totalorder %s16, 1
      %s194 = scalar_select %p193, %s16, 1
      %s195 = smul.addr %s194, 2
      %s196 = smul.addr %s195, 4
      %s197 = scalar_lea.vmem %s0, %s196
      %p198 = pneg %p37
      %p199 = pneg %p34
      %p200 = pneg %p58
      %p201 = pneg %p55
      %p202 = pneg %p79
      %p203 = pneg %p76
      %p204 = pneg %p100
      %p205 = pneg %p97
      %p206 = pneg %p121
      %p207 = pneg %p118
      %p208 = pneg %p147
      %p209 = pneg %p144
      %p210 = scmp.lt.s32.totalorder %s16, 1
      %s211 = scalar_select %p210, %s16, 1
      %s212 = smul.addr %s211, 2
      %s213 = smul.addr %s212, 4
      %s214 = scalar_lea.vmem %s5, %s213
      %p215 = scmp.lt.s32.totalorder %s16, 1
      %s216 = scalar_select %p215, %s16, 1
      %s217 = smul.addr %s216, 2
      %s218 = smul.addr %s217, 4
      %s219 = scalar_lea.vmem %s0, %s218
      %p220 = scmp.lt.s32.totalorder %s16, 1
      %s221 = scalar_select %p220, %s16, 1
      %s222 = smul.addr %s221, 2
      %s223 = smul.addr %s222, 4
      %s224 = scalar_lea.vmem %s5, %s223
      %v225 = vld [vmem:[%s2] sm:$0xff]
      %v226 = vlaneseq
      %v227 = vand.u32 %v226, 127
      %v228 = vadd.s32 %v227, 128
      %vm229 = vcmp.lt.s32.totalorder %v227, 0
      %v230 = vsub.s32 0, %v227
      %v231 = vsel %vm229, %v230, %v227
      %v232 = vshrl.u32 %v231, 4
      %v233 = vand.u32 %v231, 15
      %v234 = vsub.s32 0, %v233
      %v235 = vsel %vm229, %v234, %v233
      %vm236 = vcmp.lt.s32.totalorder %v228, 0
      %v237 = vsub.s32 0, %v228
      %v238 = vsel %vm236, %v237, %v228
      %v239 = vshrl.u32 %v238, 4
      %v240 = vand.u32 %v238, 15
      %v241 = vsub.s32 0, %v240
      %v242 = vsel %vm236, %v241, %v240
      %vm243 = vcmp.ne.s32.totalorder %v235, 0
      %vm244 = vcmp.ne.s32.totalorder %v242, 0
      %vm245 = vcmp.lt.s32.totalorder %v235, 0
      %vm246 = vcmp.lt.s32.totalorder %v242, 0
      %vm247 = vmand %vm245, %vm243
      %vm248 = vmand %vm246, %vm244
      %v249 = vadd.s32 %v235, 16
      %v250 = vadd.s32 %v242, 16
      %v251 = vsel %vm247, %v249, %v235
      %v252 = vsel %vm248, %v250, %v242
      %vm253 = vcmp.ne.s32.totalorder %v251, 0
      %vm254 = vcmp.ne.s32.totalorder %v252, 0
      %vm255 = vcmp.ne.s32.totalorder %v251, 15
      %vm256 = vcmp.ne.s32.totalorder %v252, 15
      %257 = vst [vmem:[#allocation2] sm:$0xff] 0.0
      %258 = vst [vmem:[#allocation2 + $0x18] sm:$0xff] 0.0
      %259 = vst [vmem:[#allocation3] sm:$0xff] 0.0
      %260 = vst [vmem:[#allocation3 + $0x18] sm:$0xff] 0.0
      %261 = vst [vmem:[#allocation4] sm:$0xff] 0.0
      %262 = vst [vmem:[#allocation4 + $0x18] sm:$0xff] 0.0
      %v263 = vld [vmem:[%s1] sm:$0xff]
      %v264 = vld [vmem:[%s3] sm:$0xf]
      %v265 = vld [vmem:[%s4] sm:$0xf]
      %v266 = vld [vmem:[%s219] sm:$0xff]
      %268 = vset.pattern.permute.xlu0 9
      %269 = vperm.xlu0 %268, %v225
      %v270 = vpop.permute.xlu0 %269
      %v273 = vcombine.high %v266, %v266
      %vm274 = vcmask 31744
      %v276 = vsel %vm274, %v263, 0
      %vm278 = vcmask 1043456
      %v279 = vsel %vm278, %v266, 0
      %v281 = vsel %vm278, %v273, 0
      %283 = vmatprep.subr.mxu0 0.0
      %284 = vmatpush1.msra.mxu0 0.0
      %285 = vmatprep.subr.mxu0 0.0
      %286 = vmatpush1.msra.mxu0 0.0
      %287 = vmatprep.subr.mxu0 0.0
      %288 = vmatpush1.msra.mxu0 0.0
      %289 = vmatprep.subr.mxu0 0.0
      %290 = vmatpush1.msra.mxu0 0.0
      %291 = vmatprep.subr.mxu0 0.0
      %292 = vmatpush1.msra.mxu0 0.0
      %293 = vmatprep.subr.mxu0 0.0
      %294 = vmatpush1.msra.mxu0 0.0
      %295 = vmatprep.subr.mxu0 0.0
      %296 = vmatpush1.msra.mxu0 0.0
      %297 = vmatprep.subr.mxu0 0.0
      %298 = vmatpush1.msra.mxu0 0.0
      %299 = vmatprep.subr.mxu0 0.0
      %300 = vmatpush1.msra.mxu0 0.0
      %301 = vmatprep.subr.mxu0 0.0
      %302 = vmatpush1.msra.mxu0 0.0
      %303 = vmatprep.subr.mxu0 0.0
      %304 = vmatpush1.msra.mxu0 0.0
      %305 = vmatprep.subr.mxu0 0.0
      %306 = vmatpush1.msra.mxu0 0.0
      %307 = vmatprep.subr.mxu0 0.0
      %308 = vmatpush1.msra.mxu0 0.0
      %309 = vmatprep.subr.mxu0 0.0
      %310 = vmatpush1.msra.mxu0 0.0
      %311 = vmatprep.subr.mxu0 0.0
      %312 = vmatpush1.msra.mxu0 0.0
      %313 = vmatprep.subr.mxu0 %v281
      %314 = vmatpush1.msra.mxu0 %v279
      %315 = vmatprep.subr.mxu0 0.0
      %316 = vmatpush2.msra.mxu0 0.0
      %317 = vmatprep.subr.mxu0 0.0
      %318 = vmatpush2.msra.mxu0 0.0
      %319 = vmatprep.subr.mxu0 0.0
      %320 = vmatpush2.msra.mxu0 0.0
      %321 = vmatprep.subr.mxu0 0.0
      %322 = vmatpush2.msra.mxu0 0.0
      %323 = vmatprep.subr.mxu0 0.0
      %324 = vmatpush2.msra.mxu0 0.0
      %325 = vmatprep.subr.mxu0 0.0
      %326 = vmatpush2.msra.mxu0 0.0
      %327 = vmatprep.subr.mxu0 0.0
      %328 = vmatpush2.msra.mxu0 0.0
      %329 = vmatprep.subr.mxu0 0.0
      %330 = vmatpush2.msra.mxu0 0.0
      %331 = vmatprep.subr.mxu0 0.0
      %332 = vmatpush2.msra.mxu0 0.0
      %333 = vmatprep.subr.mxu0 0.0
      %334 = vmatpush2.msra.mxu0 0.0
      %335 = vmatprep.subr.mxu0 0.0
      %336 = vmatpush2.msra.mxu0 0.0
      %337 = vmatprep.subr.mxu0 0.0
      %338 = vmatpush2.msra.mxu0 0.0
      %339 = vmatprep.subr.mxu0 0.0
      %340 = vmatpush2.msra.mxu0 0.0
      %341 = vmatprep.subr.mxu0 0.0
      %342 = vmatpush2.msra.mxu0 0.0
      %343 = vmatprep.subr.mxu0 0.0
      %344 = vmatpush2.msra.mxu0 0.0
      %345 = vmatprep.subr.mxu0 0.0
      %346 = vmatpush2.msra.mxu0 0.0
      %347 = vmatprep.mubr.f32.mxu0 0.0
      %348 = vmatmul.mubr.f32.gmra.mxu0 %v276
      %v349 = vpop.f32.mrf.mxu0
      %v350 = vadd.f32 %v270, %v349
      %v351 = vpop.f32.mrf.mxu0
      %v352 = vadd.f32 %v270, %v351
      %353 = vdwg.mxu0
      %354 = vrot.lane.b32.xlu0 %v350, 1
      %v355 = vpop.permute.xlu0 %354
      %356 = vrot.lane.b32.xlu0 %v352, 1
      %v357 = vpop.permute.xlu0 %356
      %vm358 = vcmp.lt.s32.totalorder %v227, 1
      %v359 = vsel %vm358, %v355, %v357
      %v360 = vsel %vm358, %v357, %v355
      %v361 = vsel %vm253, 1, 0
      %v362 = vsel %vm254, 1, 0
      %vm363 = vcmp.eq.s32.totalorder %v361, 1
      %vm364 = vcmp.eq.s32.totalorder %v362, 1
      %v365 = vsel %vm363, %v360, 0.0
      %v366 = vsel %vm364, %v359, 0.0
      %367 = vrot.lane.b32.xlu0 %v350, 127
      %v368 = vpop.permute.xlu0 %367
      %369 = vrot.lane.b32.xlu0 %v352, 127
      %v370 = vpop.permute.xlu0 %369
      %vm371 = vcmp.lt.s32.totalorder %v227, 127
      %v372 = vsel %vm371, %v368, %v370
      %v373 = vsel %vm371, %v370, %v368
      %v374 = vsel %vm255, 1, 0
      %v375 = vsel %vm256, 1, 0
      %vm376 = vcmp.eq.s32.totalorder %v374, 1
      %vm377 = vcmp.eq.s32.totalorder %v375, 1
      %v378 = vsel %vm376, %v372, 0.0
      %v379 = vsel %vm377, %v373, 0.0
      %380 = vst [vmem:[#allocation2 + $0x8] sm:$0xff] %v365
      %381 = vst [vmem:[#allocation2 + $0x10] sm:$0xff] %v366
      %382 = vst [vmem:[#allocation3 + $0x8] sm:$0xff] %v350
      %383 = vst [vmem:[#allocation3 + $0x10] sm:$0xff] %v352
      %384 = vst [vmem:[#allocation4 + $0x8] sm:$0xff] %v378
      %385 = vst [vmem:[#allocation4 + $0x10] sm:$0xff] %v379
      %v386 = vld [vmem:[#allocation2] sm:$0xff]
      %v387 = vld [vmem:[#allocation2 + $0x8] sm:$0xff]
      %v388 = vld [vmem:[#allocation2 + $0x10] sm:$0xff]
      %389 = vset.pattern.permute.xlu0 0
      %390 = vperm.xlu0 %389, %v225
      %v391 = vpop.permute.xlu0 %390
      %v393 = vmul.f32 %v386, %v391
      %v394 = vmul.f32 %v387, %v391
      %v395 = vmul.f32 %v388, %v391
      %v396 = vld [vmem:[#allocation3] sm:$0xff]
      %v397 = vld [vmem:[#allocation3 + $0x8] sm:$0xff]
      %v398 = vld [vmem:[#allocation3 + $0x10] sm:$0xff]
      %399 = vset.pattern.permute.xlu0 1
      %400 = vperm.xlu0 %399, %v225
      %v401 = vpop.permute.xlu0 %400
      %v403 = vmul.f32 %v396, %v401
      %v404 = vmul.f32 %v397, %v401
      %v405 = vmul.f32 %v398, %v401
      %v406 = vadd.f32 %v393, %v403
      %v407 = vadd.f32 %v394, %v404
      %v408 = vadd.f32 %v395, %v405
      %v409 = vld [vmem:[#allocation4] sm:$0xff]
      %v410 = vld [vmem:[#allocation4 + $0x8] sm:$0xff]
      %v411 = vld [vmem:[#allocation4 + $0x10] sm:$0xff]
      %412 = vset.pattern.permute.xlu0 2
      %413 = vperm.xlu0 %412, %v225
      %v414 = vpop.permute.xlu0 %413
      %v416 = vmul.f32 %v409, %v414
      %v417 = vmul.f32 %v410, %v414
      %v418 = vmul.f32 %v411, %v414
      %v419 = vadd.f32 %v406, %v416
      %v420 = vadd.f32 %v407, %v417
      %v421 = vadd.f32 %v408, %v418
      %422 = vset.pattern.permute.xlu0 3
      %423 = vperm.xlu0 %422, %v225
      %v424 = vpop.permute.xlu0 %423
      %v426 = vmul.f32 %v365, %v424
      %v427 = vmul.f32 %v366, %v424
      %430 = vrot.lane.b32.xlu0 %v426, 112
      %v431 = vpop.permute.xlu0 %430
      %432 = vrot.lane.b32.xlu0 %v427, 112
      %v433 = vpop.permute.xlu0 %432
      %vm434 = vcmask 916480
      %v435 = vsel %vm434, %v431, %v433
      %v439 = vadd.f32 %v419, %v431
      %v440 = vadd.f32 %v420, %v435
      %v441 = vadd.f32 %v421, %v433
      %442 = vset.pattern.permute.xlu0 4
      %443 = vperm.xlu0 %442, %v225
      %v444 = vpop.permute.xlu0 %443
      %v446 = vmul.f32 %v350, %v444
      %v447 = vmul.f32 %v352, %v444
      %450 = vrot.lane.b32.xlu0 %v446, 112
      %v451 = vpop.permute.xlu0 %450
      %452 = vrot.lane.b32.xlu0 %v447, 112
      %v453 = vpop.permute.xlu0 %452
      %v454 = vsel %vm434, %v451, %v453
      %v458 = vadd.f32 %v439, %v451
      %v459 = vadd.f32 %v440, %v454
      %v460 = vadd.f32 %v441, %v453
      %461 = vset.pattern.permute.xlu0 5
      %462 = vperm.xlu0 %461, %v225
      %v463 = vpop.permute.xlu0 %462
      %v465 = vmul.f32 %v378, %v463
      %v466 = vmul.f32 %v379, %v463
      %469 = vrot.lane.b32.xlu0 %v465, 112
      %v470 = vpop.permute.xlu0 %469
      %471 = vrot.lane.b32.xlu0 %v466, 112
      %v472 = vpop.permute.xlu0 %471
      %v473 = vsel %vm434, %v470, %v472
      %v477 = vadd.f32 %v458, %v470
      %v478 = vadd.f32 %v459, %v473
      %v479 = vadd.f32 %v460, %v472
      %v480 = vld [vmem:[#allocation2 + $0x8] sm:$0xff]
      %v481 = vld [vmem:[#allocation2 + $0x10] sm:$0xff]
      %v482 = vld [vmem:[#allocation2 + $0x18] sm:$0xff]
      %483 = vset.pattern.permute.xlu0 6
      %484 = vperm.xlu0 %483, %v225
      %v485 = vpop.permute.xlu0 %484
      %v487 = vmul.f32 %v480, %v485
      %v488 = vmul.f32 %v481, %v485
      %v489 = vmul.f32 %v482, %v485
      %493 = vrot.lane.b32.xlu0 %v487, 96
      %v494 = vpop.permute.xlu0 %493
      %495 = vrot.lane.b32.xlu0 %v488, 96
      %v496 = vpop.permute.xlu0 %495
      %497 = vrot.lane.b32.xlu0 %v489, 96
      %v498 = vpop.permute.xlu0 %497
      %vm499 = vcmask 785408
      %v500 = vsel %vm499, %v494, %v496
      %v501 = vsel %vm499, %v496, %v498
      %v505 = vadd.f32 %v477, %v494
      %v506 = vadd.f32 %v478, %v500
      %v507 = vadd.f32 %v479, %v501
      %v508 = vld [vmem:[#allocation3 + $0x8] sm:$0xff]
      %v509 = vld [vmem:[#allocation3 + $0x10] sm:$0xff]
      %v510 = vld [vmem:[#allocation3 + $0x18] sm:$0xff]
      %511 = vset.pattern.permute.xlu0 7
      %512 = vperm.xlu0 %511, %v225
      %v513 = vpop.permute.xlu0 %512
      %v515 = vmul.f32 %v508, %v513
      %v516 = vmul.f32 %v509, %v513
      %v517 = vmul.f32 %v510, %v513
      %521 = vrot.lane.b32.xlu0 %v515, 96
      %v522 = vpop.permute.xlu0 %521
      %523 = vrot.lane.b32.xlu0 %v516, 96
      %v524 = vpop.permute.xlu0 %523
      %525 = vrot.lane.b32.xlu0 %v517, 96
      %v526 = vpop.permute.xlu0 %525
      %v527 = vsel %vm499, %v522, %v524
      %v528 = vsel %vm499, %v524, %v526
      %v532 = vadd.f32 %v505, %v522
      %v533 = vadd.f32 %v506, %v527
      %v534 = vadd.f32 %v507, %v528
      %v535 = vld [vmem:[#allocation4 + $0x8] sm:$0xff]
      %v536 = vld [vmem:[#allocation4 + $0x10] sm:$0xff]
      %v537 = vld [vmem:[#allocation4 + $0x18] sm:$0xff]
      %538 = vset.pattern.permute.xlu0 8
      %539 = vperm.xlu0 %538, %v225
      %v540 = vpop.permute.xlu0 %539
      %v542 = vmul.f32 %v535, %v540
      %v543 = vmul.f32 %v536, %v540
      %v544 = vmul.f32 %v537, %v540
      %548 = vrot.lane.b32.xlu0 %v542, 96
      %v549 = vpop.permute.xlu0 %548
      %550 = vrot.lane.b32.xlu0 %v543, 96
      %v551 = vpop.permute.xlu0 %550
      %552 = vrot.lane.b32.xlu0 %v544, 96
      %v553 = vpop.permute.xlu0 %552
      %v554 = vsel %vm499, %v549, %v551
      %v555 = vsel %vm499, %v551, %v553
      %v559 = vadd.f32 %v532, %v549
      %v560 = vadd.f32 %v533, %v554
      %v561 = vadd.f32 %v534, %v555
      %562 = vset.pattern.permute.xlu0 10
      %563 = vperm.xlu0 %562, %v225
      %v564 = vpop.permute.xlu0 %563
      %v566 = vadd.f32 %v559, %v564
      %v567 = vadd.f32 %v560, %v564
      %v568 = vadd.f32 %v561, %v564
      %v569 = vmul.f32 %v566, 0.5
      %v570 = vmul.f32 %v567, 0.5
      %v571 = vmul.f32 %v568, 0.5
      %v572 = vmul.f32 %v566, 0.70710677
      %v573 = vmul.f32 %v567, 0.70710677
      %v574 = vmul.f32 %v568, 0.70710677
      %v575 = verf.f32.pop %v572
      %v576 = verf.f32.pop %v573
      %v577 = verf.f32.pop %v574
      %v578 = vadd.f32 %v575, 1.0
      %v579 = vadd.f32 %v576, 1.0
      %v580 = vadd.f32 %v577, 1.0
      %v581 = vmul.f32 %v569, %v578
      %v582 = vmul.f32 %v570, %v579
      %v583 = vmul.f32 %v571, %v580
      %585 = vset.pattern.permute.xlu0 0
      %586 = vperm.xlu0 %585, %v265
      %v587 = vpop.permute.xlu0 %586
      %592 = vrot.lane.b32.xlu0 %v581, 16
      %v593 = vpop.permute.xlu0 %592
      %594 = vrot.lane.b32.xlu0 %v582, 16
      %v595 = vpop.permute.xlu0 %594
      %596 = vrot.lane.b32.xlu0 %v583, 16
      %v597 = vpop.permute.xlu0 %596
      %vm598 = vcmask 130048
      %v599 = vsel %vm598, %v593, %v595
      %v600 = vsel %vm598, %v595, %v597
      %vm603 = vcmask 64512
      %v605 = vsel %vm603, %v264, 0
      %607 = vmatprep.subr.mxu0 0.0
      %608 = vmatpush1.msra.mxu0 0.0
      %609 = vmatprep.subr.mxu0 0.0
      %610 = vmatpush1.msra.mxu0 0.0
      %611 = vmatprep.subr.mxu0 0.0
      %612 = vmatpush1.msra.mxu0 0.0
      %613 = vmatprep.subr.mxu0 0.0
      %614 = vmatpush1.msra.mxu0 0.0
      %615 = vmatprep.subr.mxu0 0.0
      %616 = vmatpush1.msra.mxu0 0.0
      %617 = vmatprep.subr.mxu0 0.0
      %618 = vmatpush1.msra.mxu0 0.0
      %619 = vmatprep.subr.mxu0 0.0
      %620 = vmatpush1.msra.mxu0 0.0
      %621 = vmatprep.subr.mxu0 0.0
      %622 = vmatpush1.msra.mxu0 0.0
      %623 = vmatprep.subr.mxu0 0.0
      %624 = vmatpush1.msra.mxu0 0.0
      %625 = vmatprep.subr.mxu0 0.0
      %626 = vmatpush1.msra.mxu0 0.0
      %627 = vmatprep.subr.mxu0 0.0
      %628 = vmatpush1.msra.mxu0 0.0
      %629 = vmatprep.subr.mxu0 0.0
      %630 = vmatpush1.msra.mxu0 0.0
      %631 = vmatprep.subr.mxu0 0.0
      %632 = vmatpush1.msra.mxu0 0.0
      %633 = vmatprep.subr.mxu0 0.0
      %634 = vmatpush1.msra.mxu0 0.0
      %635 = vmatprep.subr.mxu0 0.0
      %636 = vmatpush1.msra.mxu0 0.0
      %637 = vmatprep.subr.mxu0 %v600
      %638 = vmatpush1.msra.mxu0 %v599
      %639 = vmatprep.subr.mxu0 0.0
      %640 = vmatpush2.msra.mxu0 0.0
      %641 = vmatprep.subr.mxu0 0.0
      %642 = vmatpush2.msra.mxu0 0.0
      %643 = vmatprep.subr.mxu0 0.0
      %644 = vmatpush2.msra.mxu0 0.0
      %645 = vmatprep.subr.mxu0 0.0
      %646 = vmatpush2.msra.mxu0 0.0
      %647 = vmatprep.subr.mxu0 0.0
      %648 = vmatpush2.msra.mxu0 0.0
      %649 = vmatprep.subr.mxu0 0.0
      %650 = vmatpush2.msra.mxu0 0.0
      %651 = vmatprep.subr.mxu0 0.0
      %652 = vmatpush2.msra.mxu0 0.0
      %653 = vmatprep.subr.mxu0 0.0
      %654 = vmatpush2.msra.mxu0 0.0
      %655 = vmatprep.subr.mxu0 0.0
      %656 = vmatpush2.msra.mxu0 0.0
      %657 = vmatprep.subr.mxu0 0.0
      %658 = vmatpush2.msra.mxu0 0.0
      %659 = vmatprep.subr.mxu0 0.0
      %660 = vmatpush2.msra.mxu0 0.0
      %661 = vmatprep.subr.mxu0 0.0
      %662 = vmatpush2.msra.mxu0 0.0
      %663 = vmatprep.subr.mxu0 0.0
      %664 = vmatpush2.msra.mxu0 0.0
      %665 = vmatprep.subr.mxu0 0.0
      %666 = vmatpush2.msra.mxu0 0.0
      %667 = vmatprep.subr.mxu0 0.0
      %668 = vmatpush2.msra.mxu0 0.0
      %669 = vmatprep.subr.mxu0 0.0
      %670 = vmatpush2.msra.mxu0 0.0
      %671 = vmatprep.mubr.f32.mxu0 0.0
      %672 = vmatmul.mubr.f32.gmra.mxu0 %v605
      %v673 = vpop.f32.mrf.mxu0
      %v674 = vadd.f32 %v587, %v673
      %v675 = vpop.f32.mrf.mxu0
      %v676 = vadd.f32 %v587, %v675
      %677 = vdwg.mxu0
      %v680 = vcombine.low %v674, %v676
      %682 = vst [vmem:[%s224] sm:$0xff] %v680
      %p683 = scmp.lt.s32.totalorder %s16, 1
      %s684 = scalar_select %p683, %s16, 1
      %s685 = smul.addr %s684, 2
      %s686 = smul.addr %s685, 4
      %s687 = scalar_lea.vmem %s5, %s686
      // Predicated region
      $region41: #{adaptive_lfe.1} parent=39 // pred_check
        %p688 = pneg %p144
      $region42: #{adaptive_lfe.1} parent=39 // pred_check_branch
        %690 = sbr.rel (%p688) target = $region44
      $region43: #{adaptive_lfe.1} parent=39 // pred_region
        _
      $region44: #{adaptive_lfe.1} parent=39 // pred_fallthru
        _
    $region40: #{adaptive_lfe.1} parent=5 // pred_fallthru
      _
    %p691 = scmp.le.s32.totalorder 2, %s11
    // Predicated region
    $region45: #{adaptive_lfe.1} parent=5 // pred_check
      %p692 = pneg %p691
    $region46: #{adaptive_lfe.1} parent=5 // pred_check_branch
      %694 = sbr.rel (%p692) target = $region48
    $region47: #{adaptive_lfe.1} parent=5 // pred_region
      %s695 = ssub.s32 %s11, 2
      // Predicated region
      $region49: #{adaptive_lfe.1} parent=47 // pred_check
        %p696 = pneg %p150
      $region50: #{adaptive_lfe.1} parent=47 // pred_check_branch
        %698 = sbr.rel (%p696) target = $region52
      $region51: #{adaptive_lfe.1} parent=47 // pred_region
        %p699 = scmp.lt.s32.totalorder %s17, 1
        %s700 = scalar_select %p699, %s17, 1
        %s701 = smul.addr %s700, 2
        %s702 = smul.addr %s701, 4
        %s703 = scalar_lea.vmem %s5, %s702
      $region52: #{adaptive_lfe.1} parent=47 // pred_fallthru
        _
    $region48: #{adaptive_lfe.1} parent=5 // pred_fallthru
      _
  $region6: #{adaptive_lfe.1} parent=0 // loop_footer
    %s15 = sadd.s32 1, %s11
  $region7: #{adaptive_lfe.1} parent=0 // loop_footer_branch
    %10 = sbr.rel target = $region3
  $region8: #{adaptive_lfe.1} parent=0 // loop_exit
    _

</llo_original>
